<compile_context>
chip_gen: v5e
topology: v5e:2x2
jax: 0.10.0
libtpu: 0.0.40
codegen_flags: <defaults>
</compile_context>

<pallas_src>
import functools

import jax
import jax.numpy as jnp
import numpy as np
from jax.experimental import pallas as pl
from jax.experimental.pallas import tpu as pltpu

_H1 = 128   # layer_1 width
_H2 = 32    # layer_2 width


def encoder_kernel(
    x_ref, lab_ref, eps_ref,
    w1_ref, b1_ref, w2_ref, b2_ref,
    wmx_ref, wlab_ref, bmid_ref, wfin_ref,
    out_ref,
    *, latent_dim, bf16_act,
):
    L = latent_dim
    W = L + 3                       # width of the mean / samp group

    x = x_ref[...]
    lab = lab_ref[...]
    eps = eps_ref[...]              # cols [0,L) = eps_z, [L,L+3) = eps_r
    f32 = jnp.float32

    def act(pre):
        if bf16_act:                # v6e / v7x: EUP is bf16-capable
            return jnp.tanh(pre.astype(jnp.bfloat16)).astype(f32)
        return jnp.tanh(pre)

    # layer_1 + tanh, layer_2 + tanh
    h1 = act(jnp.dot(x, w1_ref[...], preferred_element_type=f32) + b1_ref[...])
    h2 = act(jnp.dot(h1, w2_ref[...], preferred_element_type=f32) + b2_ref[...])

    # One 128-lane frame matmul: layer_4..7 heads land at their final output
    # lanes; the label/bias contributions for z and pz_mean are included too.
    mid = (jnp.dot(h2, wmx_ref[...], preferred_element_type=f32)
           + jnp.dot(lab, wlab_ref[...], preferred_element_type=f32)
           + bmid_ref[...])

    # Resampling: means at lanes [0,W), log_vars at lanes [W,2W); one fused
    # exp over [z_log_var | r_log_var].  samp = [z_samp | r_samp].
    log_var = mid[:, W:2 * W]
    samp = mid[:, 0:W] + jnp.exp(0.5 * log_var) * eps

    # wfin carries out_layer_latent (-> z lanes), an identity block routing
    # r_samp to the `r` lanes, and the pre-normalized UnitLinear regressor
    # (-> pz_mean lanes).  Adding it onto `mid` completes every output lane.
    out_ref[...] = mid + jnp.dot(samp, wfin_ref[...], preferred_element_type=f32)


def pack_params(params):
    """One-time packing of Encoder weights into the 128-lane output frame."""
    L = params["w6x"].shape[1]
    W = L + 3
    payload = 4 * L + 9
    out_w = max(128, ((payload + 127) // 128) * 128)
    f32 = jnp.float32

    # Output-frame lane offsets.
    o_zm, o_rm = 0, L                   # z_mean, r_mean
    o_zlv, o_rlv = W, W + L             # z_log_var, r_log_var (mean offset + W)
    o_z, o_r, o_pz = 2 * W, 2 * W + L, 2 * W + L + 3

    # UnitLinear: pre-normalize columns of the concatenated (3+nl, L) weight.
    wu = jnp.concatenate([params["wur"], params["wul"]], axis=0)
    wu_n = wu / (1e-07 + jnp.sqrt(jnp.sum(wu * wu, axis=0, keepdims=True)))
    wur_n, wul_n = wu_n[:3, :], wu_n[3:, :]

    def place(base, col, block):
        return base.at[:, col:col + block.shape[1]].set(block)

    # h2-side weights of layers 4..7, at final output lanes.
    wmx = jnp.zeros((_H2, out_w), f32)
    wmx = place(wmx, o_zm, params["w6x"])
    wmx = place(wmx, o_rm, params["w4x"])
    wmx = place(wmx, o_zlv, params["w7x"])
    wmx = place(wmx, o_rlv, params["w5x"])

    # label-side weights: layers 4..7 + out_layer_latent + UnitLinear label part.
    nl = params["w4l"].shape[0]
    wlab = jnp.zeros((nl, out_w), f32)
    wlab = place(wlab, o_zm, params["w6l"])
    wlab = place(wlab, o_rm, params["w4l"])
    wlab = place(wlab, o_zlv, params["w7l"])
    wlab = place(wlab, o_rlv, params["w5l"])
    wlab = place(wlab, o_z, params["woll"])
    wlab = place(wlab, o_pz, wul_n)

    # bias frame (lane-0 aligned groups, no misaligned slab slices in-kernel).
    bmid = jnp.zeros((1, out_w), f32)
    bmid = place(bmid, o_zm, params["b6"])
    bmid = place(bmid, o_rm, params["b4"])
    bmid = place(bmid, o_zlv, params["b7"])
    bmid = place(bmid, o_rlv, params["b5"])
    bmid = place(bmid, o_z, params["bol"])
    bmid = place(bmid, o_pz, params["bu"])

    # Final (L+3, out_w) weight over samp = [z_samp | r_samp].
    wfin = jnp.zeros((W, out_w), f32)
    wfin = wfin.at[0:L, o_z:o_z + L].set(params["wolz"])
    wfin = wfin.at[L:W, o_r:o_r + 3].set(jnp.eye(3, dtype=f32))
    wfin = wfin.at[L:W, o_pz:o_pz + L].set(wur_n)

    return dict(
        w1=params["w1"], b1=params["b1"], w2=params["w2"], b2=params["b2"],
        wmx=wmx, wlab=wlab, bmid=bmid, wfin=wfin,
        latent_dim=int(L), out_w=int(out_w),
    )


def split_encoder_outputs(slab, latent_dim):
    """Split the lane-dense output slab into the 7 module outputs."""
    L = latent_dim
    W = L + 3
    z_mean = slab[:, 0:L]
    r_mean = slab[:, L:W]
    z_log_var = slab[:, W:W + L]
    r_log_var = slab[:, W + L:2 * W]
    z = slab[:, 2 * W:2 * W + L]
    r = slab[:, 2 * W + L:2 * W + L + 3]
    pz_mean = slab[:, 2 * W + L + 3:2 * W + 2 * L + 3]
    return z_mean, z_log_var, z, r_mean, r_log_var, r, pz_mean


def encoder_forward(packed, x, label, eps, *, tile_m=512, bf16_act=False,
                    split=True):
    """Encoder forward as a single Pallas kernel, tiled over the batch.

    eps: (B, latent_dim + 3) standard-normal; cols [0,L)=eps_z, [L,L+3)=eps_r.
    split=False returns the raw (B, out_w) slab (consumers slice it lazily).
    """
    B, F = x.shape
    nl = label.shape[1]
    L = packed["latent_dim"]
    W = L + 3
    out_w = packed["out_w"]
    assert eps.shape == (B, W)

    # Tile selection: big tiles (512) for large batches; exactly 2 tiles for
    # medium batches (keeps both v7x TensorCores busy); >=8 sublanes always.
    Bp8 = ((max(B, 1) + 7) // 8) * 8
    if Bp8 <= 8:
        tm, Bp = Bp8, Bp8
    elif Bp8 <= 2 * tile_m:
        tm = ((-(-Bp8 // 2) + 7) // 8) * 8
        Bp = 2 * tm
    else:
        tm = tile_m
        Bp = ((Bp8 + tile_m - 1) // tile_m) * tile_m
    grid = (Bp // tm,)

    def pad_rows(a):
        return jnp.pad(a, ((0, Bp - B), (0, 0))) if Bp != B else a

    x_p, lab_p, eps_p = pad_rows(x), pad_rows(label), pad_rows(eps)

    kernel = functools.partial(encoder_kernel, latent_dim=L, bf16_act=bf16_act)

    def row_spec(w):     # batch-tiled activations
        return pl.BlockSpec((tm, w), lambda i: (i, 0))

    def full_spec(a):    # weights / biases: same (resident) block every step
        return pl.BlockSpec(a.shape, lambda i: (0, 0))

    out = pl.pallas_call(
        kernel,
        out_shape=jax.ShapeDtypeStruct((Bp, out_w), jnp.float32),
        grid=grid,
        in_specs=[
            row_spec(F), row_spec(nl), row_spec(W),
            full_spec(packed["w1"]), full_spec(packed["b1"]),
            full_spec(packed["w2"]), full_spec(packed["b2"]),
            full_spec(packed["wmx"]), full_spec(packed["wlab"]),
            full_spec(packed["bmid"]), full_spec(packed["wfin"]),
        ],
        out_specs=pl.BlockSpec((tm, out_w), lambda i: (i, 0)),
        compiler_params=pltpu.CompilerParams(
            dimension_semantics=("parallel",)),
    )(x_p, lab_p, eps_p,
      packed["w1"], packed["b1"], packed["w2"], packed["b2"],
      packed["wmx"], packed["wlab"], packed["bmid"], packed["wfin"])

    slab = out[:B] if Bp != B else out
    if not split:
        return slab
    return split_encoder_outputs(slab, L)


def make_params(key, num_feature, latent_dim, num_labels):
    """Deterministic parameter init (shapes follow the PyTorch module)."""
    ks = jax.random.split(key, 20)

    def linear(kw, kb, in_dim, out_dim):
        bound = 1.0 / np.sqrt(in_dim)
        w = jax.random.uniform(kw, (in_dim, out_dim), jnp.float32, -bound, bound)
        b = jax.random.uniform(kb, (1, out_dim), jnp.float32, -bound, bound)
        return w, b

    p = {}
    p["w1"], p["b1"] = linear(ks[0], ks[1], num_feature, _H1)
    p["w2"], p["b2"] = linear(ks[2], ks[3], _H1, _H2)

    # layers 4..7 act on cat([h2(32), label(num_labels)]); store split weights.
    for name, kidx, out_dim in (("4", 4, 3), ("5", 6, 3),
                                ("6", 8, latent_dim), ("7", 10, latent_dim)):
        w, b = linear(ks[kidx], ks[kidx + 1], _H2 + num_labels, out_dim)
        p[f"w{name}x"] = w[:_H2, :]
        p[f"w{name}l"] = w[_H2:, :]
        p[f"b{name}"] = b

    # out_layer_latent: (latent_dim + num_labels) -> latent_dim
    w, b = linear(ks[12], ks[13], latent_dim + num_labels, latent_dim)
    p["wolz"] = w[:latent_dim, :]
    p["woll"] = w[latent_dim:, :]
    p["bol"] = b

    # UnitLinear out_layer_regressor: weight ~ U(0,1), bias zeros
    wu = jax.random.uniform(ks[14], (3 + num_labels, latent_dim),
                            jnp.float32, 0.0, 1.0)
    p["wur"] = wu[:3, :]
    p["wul"] = wu[3:, :]
    p["bu"] = jnp.zeros((1, latent_dim), jnp.float32)
    return p


def encoder_reference(params, x, label, eps):
    """Pure-JAX reference (unpacked weights) for correctness checking."""
    L = params["w6x"].shape[1]
    eps_z, eps_r = eps[:, :L], eps[:, L:]
    h = jnp.tanh(x @ params["w1"] + params["b1"])
    h = jnp.tanh(h @ params["w2"] + params["b2"])

    def cat_linear(wx, wl, b):
        return h @ wx + label @ wl + b

    r_mean = cat_linear(params["w4x"], params["w4l"], params["b4"])
    r_log_var = cat_linear(params["w5x"], params["w5l"], params["b5"])
    z_mean = cat_linear(params["w6x"], params["w6l"], params["b6"])
    z_log_var = cat_linear(params["w7x"], params["w7l"], params["b7"])
    r = r_mean + jnp.exp(0.5 * r_log_var) * eps_r
    z_s = z_mean + jnp.exp(0.5 * z_log_var) * eps_z
    z = z_s @ params["wolz"] + label @ params["woll"] + params["bol"]
    wu = jnp.concatenate([params["wur"], params["wul"]], axis=0)
    wu_n = wu / (1e-07 + jnp.sqrt(jnp.sum(wu * wu, axis=0, keepdims=True)))
    pz_mean = jnp.concatenate([r, label], axis=1) @ wu_n + params["bu"]
    return z_mean, z_log_var, z, r_mean, r_log_var, r, pz_mean


def _check(params, packed, key, B, num_feature, latent_dim, num_labels,
           *, bf16_act=False, atol=2e-5, rtol=2e-5):
    k_x, k_lab, k_eps = jax.random.split(key, 3)
    x = jax.random.normal(k_x, (B, num_feature), jnp.float32)
    label = (jax.random.uniform(k_lab, (B, num_labels)) > 0.5).astype(jnp.float32)
    eps = jax.random.normal(k_eps, (B, latent_dim + 3), jnp.float32)

    outs = jax.block_until_ready(
        encoder_forward(packed, x, label, eps, bf16_act=bf16_act))
    refs = encoder_reference(params, x, label, eps)
    names = ("z_mean", "z_log_var", "z", "r_mean", "r_log_var", "r", "pz_mean")
    for name, o, r in zip(names, outs, refs):
        assert o.shape == r.shape and o.dtype == r.dtype
        if not bool(jnp.allclose(o, r, atol=atol, rtol=rtol)):
            err = float(jnp.max(jnp.abs(o - r)))
            raise AssertionError(
                f"Pallas output mismatch vs reference in {name}: max|err|={err}")


if __name__ == "__main__":
    num_feature = 16
    latent_dim = 8
    num_labels = 4

    key = jax.random.PRNGKey(0)
    k_param, k_small, k_mid, k_bf16, k_big = jax.random.split(key, 5)

    params = make_params(k_param, num_feature, latent_dim, num_labels)
    packed = pack_params(params)

    # Small batch (B=4 -> padded to 8 sublanes, single grid step).
    _check(params, packed, k_small, 4, num_feature, latent_dim, num_labels)
    # Medium batch -> exactly 2 tiles of 80 rows ("parallel" axis, v7x-friendly).
    _check(params, packed, k_mid, 160, num_feature, latent_dim, num_labels)
    # Larger batch exercising the 512-row-tile path (4 grid steps).
    _check(params, packed, k_big, 1600, num_feature, latent_dim, num_labels)

    # bf16 tanh path (v6e / v7x EUP); skipped on older generations per review.
    kind = jax.devices()[0].device_kind.lower()
    if not any(t in kind for t in ("v2", "v3", "v4", "v5")):
        _check(params, packed, k_bf16, 96, num_feature, latent_dim, num_labels,
               bf16_act=True, atol=1e-1, rtol=1e-1)

    print("KERNEL_OK")
</pallas_src>

<mosaic_0001>
module attributes {stable_mosaic.version = 11 : i64} {
  func.func @encoder_kernel(%arg0: i32, %arg1: memref<8x16xf32, #tpu.memory_space<vmem>>, %arg2: memref<8x4xf32, #tpu.memory_space<vmem>>, %arg3: memref<8x11xf32, #tpu.memory_space<vmem>>, %arg4: memref<16x128xf32, #tpu.memory_space<vmem>>, %arg5: memref<1x128xf32, #tpu.memory_space<vmem>>, %arg6: memref<128x32xf32, #tpu.memory_space<vmem>>, %arg7: memref<1x32xf32, #tpu.memory_space<vmem>>, %arg8: memref<32x128xf32, #tpu.memory_space<vmem>>, %arg9: memref<4x128xf32, #tpu.memory_space<vmem>>, %arg10: memref<1x128xf32, #tpu.memory_space<vmem>>, %arg11: memref<11x128xf32, #tpu.memory_space<vmem>>, %arg12: memref<8x128xf32, #tpu.memory_space<vmem>>) attributes {dimension_semantics = [#tpu.dimension_semantics<parallel>], iteration_bounds = array<i64: 1>, scalar_prefetch = 0 : i64, scratch_operands = 0 : i64, tpu.core_type = #tpu.core_type<tc>, window_params = [{transform_indices = @transform_0, window_bounds = array<i64: 8, 16>}, {transform_indices = @transform_1, window_bounds = array<i64: 8, 4>}, {transform_indices = @transform_2, window_bounds = array<i64: 8, 11>}, {pipeline_mode = #tpu.pipeline_mode<synchronous>, transform_indices = @transform_3, window_bounds = array<i64: 16, 128>}, {pipeline_mode = #tpu.pipeline_mode<synchronous>, transform_indices = @transform_4, window_bounds = array<i64: 1, 128>}, {pipeline_mode = #tpu.pipeline_mode<synchronous>, transform_indices = @transform_5, window_bounds = array<i64: 128, 32>}, {pipeline_mode = #tpu.pipeline_mode<synchronous>, transform_indices = @transform_6, window_bounds = array<i64: 1, 32>}, {pipeline_mode = #tpu.pipeline_mode<synchronous>, transform_indices = @transform_7, window_bounds = array<i64: 32, 128>}, {pipeline_mode = #tpu.pipeline_mode<synchronous>, transform_indices = @transform_8, window_bounds = array<i64: 4, 128>}, {pipeline_mode = #tpu.pipeline_mode<synchronous>, transform_indices = @transform_9, window_bounds = array<i64: 1, 128>}, {pipeline_mode = #tpu.pipeline_mode<synchronous>, transform_indices = @transform_10, window_bounds = array<i64: 11, 128>}, {transform_indices = @transform_11, window_bounds = array<i64: 8, 128>}]} {
    %c0 = arith.constant 0 : index
    %c0_0 = arith.constant 0 : index
    %0 = vector.load %arg1[%c0, %c0_0] : memref<8x16xf32, #tpu.memory_space<vmem>>, vector<8x16xf32>
    %c0_1 = arith.constant 0 : index
    %c0_2 = arith.constant 0 : index
    %1 = vector.load %arg2[%c0_1, %c0_2] : memref<8x4xf32, #tpu.memory_space<vmem>>, vector<8x4xf32>
    %c0_3 = arith.constant 0 : index
    %c0_4 = arith.constant 0 : index
    %2 = vector.load %arg3[%c0_3, %c0_4] : memref<8x11xf32, #tpu.memory_space<vmem>>, vector<8x11xf32>
    %c0_5 = arith.constant 0 : index
    %c0_6 = arith.constant 0 : index
    %3 = vector.load %arg4[%c0_5, %c0_6] : memref<16x128xf32, #tpu.memory_space<vmem>>, vector<16x128xf32>
    %cst = arith.constant dense<0.000000e+00> : vector<8x128xf32>
    %4 = tpu.matmul %0, %3, %cst {dimension_numbers = #tpu.dot_dimension_numbers<[1], [0], [0], [1], [0, 0, 1, 1], [], []>} : vector<8x16xf32>, vector<16x128xf32>, vector<8x128xf32> -> vector<8x128xf32>
    %c0_7 = arith.constant 0 : index
    %c0_8 = arith.constant 0 : index
    %5 = vector.load %arg5[%c0_7, %c0_8] : memref<1x128xf32, #tpu.memory_space<vmem>>, vector<1x128xf32>
    %6 = vector.broadcast %5 : vector<1x128xf32> to vector<8x128xf32>
    %7 = arith.addf %4, %6 : vector<8x128xf32>
    %8 = math.tanh %7 : vector<8x128xf32>
    %c0_9 = arith.constant 0 : index
    %c0_10 = arith.constant 0 : index
    %9 = vector.load %arg6[%c0_9, %c0_10] : memref<128x32xf32, #tpu.memory_space<vmem>>, vector<128x32xf32>
    %cst_11 = arith.constant dense<0.000000e+00> : vector<8x32xf32>
    %10 = tpu.matmul %8, %9, %cst_11 {dimension_numbers = #tpu.dot_dimension_numbers<[1], [0], [0], [1], [0, 0, 1, 1], [], []>} : vector<8x128xf32>, vector<128x32xf32>, vector<8x32xf32> -> vector<8x32xf32>
    %c0_12 = arith.constant 0 : index
    %c0_13 = arith.constant 0 : index
    %11 = vector.load %arg7[%c0_12, %c0_13] : memref<1x32xf32, #tpu.memory_space<vmem>>, vector<1x32xf32>
    %12 = vector.broadcast %11 : vector<1x32xf32> to vector<8x32xf32>
    %13 = arith.addf %10, %12 : vector<8x32xf32>
    %14 = math.tanh %13 : vector<8x32xf32>
    %c0_14 = arith.constant 0 : index
    %c0_15 = arith.constant 0 : index
    %15 = vector.load %arg8[%c0_14, %c0_15] : memref<32x128xf32, #tpu.memory_space<vmem>>, vector<32x128xf32>
    %cst_16 = arith.constant dense<0.000000e+00> : vector<8x128xf32>
    %16 = tpu.matmul %14, %15, %cst_16 {dimension_numbers = #tpu.dot_dimension_numbers<[1], [0], [0], [1], [0, 0, 1, 1], [], []>} : vector<8x32xf32>, vector<32x128xf32>, vector<8x128xf32> -> vector<8x128xf32>
    %c0_17 = arith.constant 0 : index
    %c0_18 = arith.constant 0 : index
    %17 = vector.load %arg9[%c0_17, %c0_18] : memref<4x128xf32, #tpu.memory_space<vmem>>, vector<4x128xf32>
    %cst_19 = arith.constant dense<0.000000e+00> : vector<8x128xf32>
    %18 = tpu.matmul %1, %17, %cst_19 {dimension_numbers = #tpu.dot_dimension_numbers<[1], [0], [0], [1], [0, 0, 1, 1], [], []>} : vector<8x4xf32>, vector<4x128xf32>, vector<8x128xf32> -> vector<8x128xf32>
    %19 = arith.addf %16, %18 : vector<8x128xf32>
    %c0_20 = arith.constant 0 : index
    %c0_21 = arith.constant 0 : index
    %20 = vector.load %arg10[%c0_20, %c0_21] : memref<1x128xf32, #tpu.memory_space<vmem>>, vector<1x128xf32>
    %21 = vector.broadcast %20 : vector<1x128xf32> to vector<8x128xf32>
    %22 = arith.addf %19, %21 : vector<8x128xf32>
    %23 = vector.extract_strided_slice %22 {offsets = [0, 11], sizes = [8, 11], strides = [1, 1]} : vector<8x128xf32> to vector<8x11xf32>
    %24 = vector.extract_strided_slice %22 {offsets = [0, 0], sizes = [8, 11], strides = [1, 1]} : vector<8x128xf32> to vector<8x11xf32>
    %cst_22 = arith.constant 5.000000e-01 : f32
    %25 = vector.broadcast %cst_22 : f32 to vector<8x11xf32>
    %26 = arith.mulf %25, %23 : vector<8x11xf32>
    %27 = math.exp %26 : vector<8x11xf32>
    %28 = arith.mulf %27, %2 : vector<8x11xf32>
    %29 = arith.addf %24, %28 : vector<8x11xf32>
    %c0_23 = arith.constant 0 : index
    %c0_24 = arith.constant 0 : index
    %30 = vector.load %arg11[%c0_23, %c0_24] : memref<11x128xf32, #tpu.memory_space<vmem>>, vector<11x128xf32>
    %cst_25 = arith.constant dense<0.000000e+00> : vector<8x128xf32>
    %31 = tpu.matmul %29, %30, %cst_25 {dimension_numbers = #tpu.dot_dimension_numbers<[1], [0], [0], [1], [0, 0, 1, 1], [], []>} : vector<8x11xf32>, vector<11x128xf32>, vector<8x128xf32> -> vector<8x128xf32>
    %32 = arith.addf %22, %31 : vector<8x128xf32>
    %c0_26 = arith.constant 0 : index
    %c0_27 = arith.constant 0 : index
    %33 = vector.load %arg12[%c0_26, %c0_27] : memref<8x128xf32, #tpu.memory_space<vmem>>, vector<8x128xf32>
    tpu.vector_store %arg12[%c0_26, %c0_27], %32 {strides = array<i32>} : memref<8x128xf32, #tpu.memory_space<vmem>>, vector<8x128xf32>,
    return
  }
  func.func @transform_0(%arg0: i32) -> (i32, i32) {
    %c0_i32 = arith.constant 0 : i32
    %c0_i32_0 = arith.constant 0 : i32
    return %arg0, %c0_i32 : i32, i32
  }
  func.func @transform_1(%arg0: i32) -> (i32, i32) {
    %c0_i32 = arith.constant 0 : i32
    %c0_i32_0 = arith.constant 0 : i32
    return %arg0, %c0_i32 : i32, i32
  }
  func.func @transform_2(%arg0: i32) -> (i32, i32) {
    %c0_i32 = arith.constant 0 : i32
    %c0_i32_0 = arith.constant 0 : i32
    return %arg0, %c0_i32 : i32, i32
  }
  func.func @transform_3(%arg0: i32) -> (i32, i32) {
    %c0_i32 = arith.constant 0 : i32
    %c0_i32_0 = arith.constant 0 : i32
    %c0_i32_1 = arith.constant 0 : i32
    return %c0_i32, %c0_i32_0 : i32, i32
  }
  func.func @transform_4(%arg0: i32) -> (i32, i32) {
    %c0_i32 = arith.constant 0 : i32
    %c0_i32_0 = arith.constant 0 : i32
    %c0_i32_1 = arith.constant 0 : i32
    return %c0_i32, %c0_i32_0 : i32, i32
  }
  func.func @transform_5(%arg0: i32) -> (i32, i32) {
    %c0_i32 = arith.constant 0 : i32
    %c0_i32_0 = arith.constant 0 : i32
    %c0_i32_1 = arith.constant 0 : i32
    return %c0_i32, %c0_i32_0 : i32, i32
  }
  func.func @transform_6(%arg0: i32) -> (i32, i32) {
    %c0_i32 = arith.constant 0 : i32
    %c0_i32_0 = arith.constant 0 : i32
    %c0_i32_1 = arith.constant 0 : i32
    return %c0_i32, %c0_i32_0 : i32, i32
  }
  func.func @transform_7(%arg0: i32) -> (i32, i32) {
    %c0_i32 = arith.constant 0 : i32
    %c0_i32_0 = arith.constant 0 : i32
    %c0_i32_1 = arith.constant 0 : i32
    return %c0_i32, %c0_i32_0 : i32, i32
  }
  func.func @transform_8(%arg0: i32) -> (i32, i32) {
    %c0_i32 = arith.constant 0 : i32
    %c0_i32_0 = arith.constant 0 : i32
    %c0_i32_1 = arith.constant 0 : i32
    return %c0_i32, %c0_i32_0 : i32, i32
  }
  func.func @transform_9(%arg0: i32) -> (i32, i32) {
    %c0_i32 = arith.constant 0 : i32
    %c0_i32_0 = arith.constant 0 : i32
    %c0_i32_1 = arith.constant 0 : i32
    return %c0_i32, %c0_i32_0 : i32, i32
  }
  func.func @transform_10(%arg0: i32) -> (i32, i32) {
    %c0_i32 = arith.constant 0 : i32
    %c0_i32_0 = arith.constant 0 : i32
    %c0_i32_1 = arith.constant 0 : i32
    return %c0_i32, %c0_i32_0 : i32, i32
  }
  func.func @transform_11(%arg0: i32) -> (i32, i32) {
    %c0_i32 = arith.constant 0 : i32
    %c0_i32_0 = arith.constant 0 : i32
    return %arg0, %c0_i32 : i32, i32
  }
}

</mosaic_0001>

<llo_original>
// kernel: tpu_custom_call.1
$region0: #{tpu_custom_call.1}
  #allocation0 [shape = 'u32[]', space=smem, size = 0x4, offset = 0x4, fixed_abs, tag = 'smem constant byte address 0x4 - core index']
  #allocation1 [shape = 'u32[72,128]{1,0:T(1,128)}', space=vmem, size = 0x9000, scoped, tag = 'internal scratch']
  %s0 = inlined_call_operand.vmem [shape: f32[8,16], index: 0, kind: input, shape index: {}]
  %s1 = inlined_call_operand.vmem [shape: f32[8,4], index: 1, kind: input, shape index: {}]
  %s2 = inlined_call_operand.vmem [shape: f32[8,11], index: 2, kind: input, shape index: {}]
  %s3 = inlined_call_operand.vmem [shape: f32[16,128], index: 3, kind: input, shape index: {}]
  %s4 = inlined_call_operand.vmem [shape: f32[1,128], index: 4, kind: input, shape index: {}]
  %s5 = inlined_call_operand.vmem [shape: f32[128,32], index: 5, kind: input, shape index: {}]
  %s6 = inlined_call_operand.vmem [shape: f32[1,32], index: 6, kind: input, shape index: {}]
  %s7 = inlined_call_operand.vmem [shape: f32[32,128], index: 7, kind: input, shape index: {}]
  %s8 = inlined_call_operand.vmem [shape: f32[4,128], index: 8, kind: input, shape index: {}]
  %s9 = inlined_call_operand.vmem [shape: f32[1,128], index: 9, kind: input, shape index: {}]
  %s10 = inlined_call_operand.vmem [shape: f32[11,128], index: 10, kind: input, shape index: {}]
  %s11 = inlined_call_operand.hbm [shape: f32[8,128], index: 11, kind: output, shape index: {}]
  %s12 = sld [smem:[#allocation0]]
  $region54: #{tpu_custom_call.1} parent=0
    _
  %s14 = ssub.s32 1, %s12
  %s15 = scalar_select 0, %s14, %s12
  $region1: #{tpu_custom_call.1} parent=0
    #allocation2 [shape = 'u8[4096]{0}', space=vmem, size = 0x1000, scoped, tag = 'output window, operand 0, single buffered']
    #allocation3 [shape = 's32[1]{0}', space=sflag, size = 0x4, scoped, tag = 'scoped memory for tpu_custom_call.1']
    %16 = vsyncpa [#allocation3], 0
    // Predicated region
    $region2: #{tpu_custom_call.1} parent=1 // pred_check
      _
    $region3: #{tpu_custom_call.1} parent=1 // pred_check_branch
      %18 = sbr.rel (0) target = $region5
    $region4: #{tpu_custom_call.1} parent=1 // pred_region
      _
    $region5: #{tpu_custom_call.1} parent=1 // pred_fallthru
      _
    // Predicated region
    $region6: #{tpu_custom_call.1} parent=1 // pred_check
      _
    $region7: #{tpu_custom_call.1} parent=1 // pred_check_branch
      %20 = sbr.rel (0) target = $region9
    $region8: #{tpu_custom_call.1} parent=1 // pred_region
      _
    $region9: #{tpu_custom_call.1} parent=1 // pred_fallthru
      _
    // Predicated region
    $region10: #{tpu_custom_call.1} parent=1 // pred_check
      _
    $region11: #{tpu_custom_call.1} parent=1 // pred_check_branch
      %22 = sbr.rel (0) target = $region13
    $region12: #{tpu_custom_call.1} parent=1 // pred_region
      _
    $region13: #{tpu_custom_call.1} parent=1 // pred_fallthru
      _
    // Predicated region
    $region14: #{tpu_custom_call.1} parent=1 // pred_check
      _
    $region15: #{tpu_custom_call.1} parent=1 // pred_check_branch
      %24 = sbr.rel (0) target = $region17
    $region16: #{tpu_custom_call.1} parent=1 // pred_region
      _
    $region17: #{tpu_custom_call.1} parent=1 // pred_fallthru
      _
    // Predicated region
    $region18: #{tpu_custom_call.1} parent=1 // pred_check
      _
    $region19: #{tpu_custom_call.1} parent=1 // pred_check_branch
      %26 = sbr.rel (0) target = $region21
    $region20: #{tpu_custom_call.1} parent=1 // pred_region
      _
    $region21: #{tpu_custom_call.1} parent=1 // pred_fallthru
      _
    // Predicated region
    $region22: #{tpu_custom_call.1} parent=1 // pred_check
      _
    $region23: #{tpu_custom_call.1} parent=1 // pred_check_branch
      %28 = sbr.rel (0) target = $region25
    $region24: #{tpu_custom_call.1} parent=1 // pred_region
      _
    $region25: #{tpu_custom_call.1} parent=1 // pred_fallthru
      _
    // Predicated region
    $region26: #{tpu_custom_call.1} parent=1 // pred_check
      _
    $region27: #{tpu_custom_call.1} parent=1 // pred_check_branch
      %30 = sbr.rel (0) target = $region29
    $region28: #{tpu_custom_call.1} parent=1 // pred_region
      _
    $region29: #{tpu_custom_call.1} parent=1 // pred_fallthru
      _
    // Predicated region
    $region30: #{tpu_custom_call.1} parent=1 // pred_check
      _
    $region31: #{tpu_custom_call.1} parent=1 // pred_check_branch
      %32 = sbr.rel (0) target = $region33
    $region32: #{tpu_custom_call.1} parent=1 // pred_region
      _
    $region33: #{tpu_custom_call.1} parent=1 // pred_fallthru
      _
    // Predicated region
    $region34: #{tpu_custom_call.1} parent=1 // pred_check
      _
    $region35: #{tpu_custom_call.1} parent=1 // pred_check_branch
      %34 = sbr.rel (0) target = $region37
    $region36: #{tpu_custom_call.1} parent=1 // pred_region
      _
    $region37: #{tpu_custom_call.1} parent=1 // pred_fallthru
      _
    // Predicated region
    $region38: #{tpu_custom_call.1} parent=1 // pred_check
      _
    $region39: #{tpu_custom_call.1} parent=1 // pred_check_branch
      %36 = sbr.rel (0) target = $region41
    $region40: #{tpu_custom_call.1} parent=1 // pred_region
      _
    $region41: #{tpu_custom_call.1} parent=1 // pred_fallthru
      _
    // Predicated region
    $region42: #{tpu_custom_call.1} parent=1 // pred_check
      _
    $region43: #{tpu_custom_call.1} parent=1 // pred_check_branch
      %38 = sbr.rel (0) target = $region45
    $region44: #{tpu_custom_call.1} parent=1 // pred_region
      _
    $region45: #{tpu_custom_call.1} parent=1 // pred_fallthru
      _
    %v39 = vld [vmem:[%s0] sm:$0xff]
    %v40 = vld [vmem:[%s1] sm:$0xff]
    %v41 = vld [vmem:[%s2] sm:$0xff]
    %v42 = vld [vmem:[%s3] sm:$0xff]
    %v43 = vld [vmem:[%s3 + $0x8] sm:$0xff]
    %v44 = vld [vmem:[%s4] sm:$0x1]
    %v46 = vperm.slane %v44, 0
    %vm48 = vcmask 130048
    %v50 = vsel %vm48, %v39, 0
    %52 = vmatpush.msra.mxu0 0.0
    %53 = vmatpush.msra.mxu0 0.0
    %54 = vmatpush.msra.mxu0 0.0
    %55 = vmatpush.msra.mxu0 0.0
    %56 = vmatpush.msra.mxu0 0.0
    %57 = vmatpush.msra.mxu0 0.0
    %58 = vmatpush.msra.mxu0 0.0
    %59 = vmatpush.msra.mxu0 0.0
    %60 = vmatpush.msra.mxu0 0.0
    %61 = vmatpush.msra.mxu0 0.0
    %62 = vmatpush.msra.mxu0 0.0
    %63 = vmatpush.msra.mxu0 0.0
    %64 = vmatpush.msra.mxu0 0.0
    %65 = vmatpush.msra.mxu0 0.0
    %66 = vmatpush.msra.mxu0 %v43
    %67 = vmatpush.msra.mxu0 %v42
    %68 = vmatmul.f32.gmra.mxu0 %v50
    %v69 = vpop.f32.mrf.mxu0
    %v70 = vadd.f32 %v46, %v69
    %71 = vdwg.mxu0
    %v72 = vtanh.pop %v70
    %v73 = vld [vmem:[%s5] sm:$0xff]
    %v74 = vld [vmem:[%s5 + $0x8] sm:$0xff]
    %v75 = vld [vmem:[%s5 + $0x10] sm:$0xff]
    %v76 = vld [vmem:[%s5 + $0x18] sm:$0xff]
    %v77 = vld [vmem:[%s5 + $0x20] sm:$0xff]
    %v78 = vld [vmem:[%s5 + $0x28] sm:$0xff]
    %v79 = vld [vmem:[%s5 + $0x30] sm:$0xff]
    %v80 = vld [vmem:[%s5 + $0x38] sm:$0xff]
    %v81 = vld [vmem:[%s5 + $0x40] sm:$0xff]
    %v82 = vld [vmem:[%s5 + $0x48] sm:$0xff]
    %v83 = vld [vmem:[%s5 + $0x50] sm:$0xff]
    %v84 = vld [vmem:[%s5 + $0x58] sm:$0xff]
    %v85 = vld [vmem:[%s5 + $0x60] sm:$0xff]
    %v86 = vld [vmem:[%s5 + $0x68] sm:$0xff]
    %v87 = vld [vmem:[%s5 + $0x70] sm:$0xff]
    %v88 = vld [vmem:[%s5 + $0x78] sm:$0xff]
    %v89 = vld [vmem:[%s6] sm:$0x1]
    %v91 = vperm.slane %v89, 0
    %93 = vmatpush.msra.mxu0 %v88
    %94 = vmatpush.msra.mxu0 %v87
    %95 = vmatpush.msra.mxu0 %v86
    %96 = vmatpush.msra.mxu0 %v85
    %97 = vmatpush.msra.mxu0 %v84
    %98 = vmatpush.msra.mxu0 %v83
    %99 = vmatpush.msra.mxu0 %v82
    %100 = vmatpush.msra.mxu0 %v81
    %101 = vmatpush.msra.mxu0 %v80
    %102 = vmatpush.msra.mxu0 %v79
    %103 = vmatpush.msra.mxu0 %v78
    %104 = vmatpush.msra.mxu0 %v77
    %105 = vmatpush.msra.mxu0 %v76
    %106 = vmatpush.msra.mxu0 %v75
    %107 = vmatpush.msra.mxu0 %v74
    %108 = vmatpush.msra.mxu0 %v73
    %109 = vmatmul.f32.gmra.mxu0 %v72
    %v110 = vpop.f32.mrf.mxu0
    %v111 = vadd.f32 %v91, %v110
    %112 = vdwg.mxu0
    %v113 = vtanh.pop %v111
    %v114 = vld [vmem:[%s7] sm:$0xff]
    %v115 = vld [vmem:[%s7 + $0x8] sm:$0xff]
    %v116 = vld [vmem:[%s7 + $0x10] sm:$0xff]
    %v117 = vld [vmem:[%s7 + $0x18] sm:$0xff]
    %v118 = vld [vmem:[%s8] sm:$0xf]
    %vm119 = vcmask 31744
    %v121 = vsel %vm119, %v40, 0
    %vm123 = vcmask 1043456
    %v125 = vsel %vm123, %v118, 0
    %127 = vmatpush.msra.mxu0 0.0
    %128 = vmatpush.msra.mxu0 0.0
    %129 = vmatpush.msra.mxu0 0.0
    %130 = vmatpush.msra.mxu0 0.0
    %131 = vmatpush.msra.mxu0 0.0
    %132 = vmatpush.msra.mxu0 0.0
    %133 = vmatpush.msra.mxu0 0.0
    %134 = vmatpush.msra.mxu0 0.0
    %135 = vmatpush.msra.mxu0 0.0
    %136 = vmatpush.msra.mxu0 0.0
    %137 = vmatpush.msra.mxu0 0.0
    %138 = vmatpush.msra.mxu0 0.0
    %139 = vmatpush.msra.mxu0 0.0
    %140 = vmatpush.msra.mxu0 0.0
    %141 = vmatpush.msra.mxu0 0.0
    %142 = vmatpush.msra.mxu0 %v125
    %143 = vmatmul.f32.gmra.mxu0 %v121
    %v144 = vpop.f32.mrf.mxu0
    %v145 = vadd.f32 0.0, %v144
    %146 = vdwg.mxu0
    %vm147 = vcmask 261120
    %v149 = vsel %vm147, %v113, 0
    %151 = vmatpush.msra.mxu0 0.0
    %152 = vmatpush.msra.mxu0 0.0
    %153 = vmatpush.msra.mxu0 0.0
    %154 = vmatpush.msra.mxu0 0.0
    %155 = vmatpush.msra.mxu0 0.0
    %156 = vmatpush.msra.mxu0 0.0
    %157 = vmatpush.msra.mxu0 0.0
    %158 = vmatpush.msra.mxu0 0.0
    %159 = vmatpush.msra.mxu0 0.0
    %160 = vmatpush.msra.mxu0 0.0
    %161 = vmatpush.msra.mxu0 0.0
    %162 = vmatpush.msra.mxu0 0.0
    %163 = vmatpush.msra.mxu0 %v117
    %164 = vmatpush.msra.mxu0 %v116
    %165 = vmatpush.msra.mxu0 %v115
    %166 = vmatpush.msra.mxu0 %v114
    %167 = vmatmul.f32.gmra.mxu0 %v149
    %v168 = vpop.f32.mrf.mxu0
    %v169 = vadd.f32 %v145, %v168
    %170 = vdwg.mxu0
    %v171 = vld [vmem:[%s9] sm:$0x1]
    %v173 = vperm.slane %v171, 0
    %v175 = vadd.f32 %v169, %v173
    %v176 = vmul.f32 %v175, 0.5
    %v177 = vmul.f32 %v176, 1.442695
    %v178 = vpow.pop %v177
    %180 = vrot.lane.b32.xlu0 %v41, 11
    %v181 = vpop.permute.xlu0 %180
    %v183 = vmul.f32 %v178, %v181
    %185 = vrot.lane.b32.xlu0 %v183, 117
    %v186 = vpop.permute.xlu0 %185
    %v188 = vadd.f32 %v175, %v186
    %v189 = vld [vmem:[%s10] sm:$0xff]
    %v190 = vld [vmem:[%s10 + $0x8] sm:$0x7]
    %vm191 = vcmask 89088
    %v193 = vsel %vm191, %v188, 0
    %vm195 = vcmask 1042432
    %v197 = vsel %vm195, %v190, 0
    %199 = vmatpush.msra.mxu0 0.0
    %200 = vmatpush.msra.mxu0 0.0
    %201 = vmatpush.msra.mxu0 0.0
    %202 = vmatpush.msra.mxu0 0.0
    %203 = vmatpush.msra.mxu0 0.0
    %204 = vmatpush.msra.mxu0 0.0
    %205 = vmatpush.msra.mxu0 0.0
    %206 = vmatpush.msra.mxu0 0.0
    %207 = vmatpush.msra.mxu0 0.0
    %208 = vmatpush.msra.mxu0 0.0
    %209 = vmatpush.msra.mxu0 0.0
    %210 = vmatpush.msra.mxu0 0.0
    %211 = vmatpush.msra.mxu0 0.0
    %212 = vmatpush.msra.mxu0 0.0
    %213 = vmatpush.msra.mxu0 %v197
    %214 = vmatpush.msra.mxu0 %v189
    %215 = vmatmul.f32.gmra.mxu0 %v193
    %v216 = vpop.f32.mrf.mxu0
    %v217 = vadd.f32 0.0, %v216
    %218 = vdwg.mxu0
    %v219 = vadd.f32 %v175, %v217
    %220 = vst [vmem:[#allocation2] sm:$0xff] %v219
    // Predicated region
    $region46: #{tpu_custom_call.1} parent=1 // pred_check
      _
    $region47: #{tpu_custom_call.1} parent=1 // pred_check_branch
      %222 = sbr.rel (0) target = $region49
    $region48: #{tpu_custom_call.1} parent=1 // pred_region
      %224 = vsyncadd [#allocation3], 0
      %s226 = sshll.u32 [#allocation2], 4
      %s227 = int_to_ptr.vmem [resolvable:$true] %s226
      %s228 = sshll.u32 %s11, 4
      %s229 = int_to_ptr.hbm [resolvable:$true] %s228
      %231 = dma.vmem_to_hbm [thread:$0]  %s227, 128, %s229, [#allocation3]
    $region49: #{tpu_custom_call.1} parent=1 // pred_fallthru
      _
    // Predicated region
    $region50: #{tpu_custom_call.1} parent=1 // pred_check
      _
    $region51: #{tpu_custom_call.1} parent=1 // pred_check_branch
      %233 = sbr.rel (0) target = $region53
    $region52: #{tpu_custom_call.1} parent=1 // pred_region
      %235 = dma.done [#allocation3], 128
    $region53: #{tpu_custom_call.1} parent=1 // pred_fallthru
      _
    %236 = vsyncpa [#allocation3], 1

</llo_original>
